<compile_context>
chip_gen: v6e
topology: v6e:2x2x1
jax: 0.10.0
libtpu: 0.0.40
codegen_flags: <defaults>
</compile_context>

<pallas_src>
import functools

import jax
import jax.numpy as jnp
from jax.experimental import pallas as pl
from jax.experimental.pallas import tpu as pltpu

_MIB = 1024 * 1024


def _round_up(v, m):
    return (v + m - 1) // m * m


def _pad2(a, rows, cols):
    pr, pc = rows - a.shape[0], cols - a.shape[1]
    if pr == 0 and pc == 0:
        return a  # skip the extra HBM pass when already aligned
    return jnp.pad(a, ((0, pr), (0, pc)))


def _vmem_usage(tm, tk, n_p, in_p, out_p, in_isz, out_isz, x_resident):
    adj = 2 * tm * tk * in_isz                         # double-buffered adj tiles
    xb = 2 * (n_p if x_resident else tk) * in_p * in_isz
    wb = 2 * in_p * out_p * in_isz                     # W^T (constant index)
    ob = 2 * tm * out_p * out_isz                      # output tiles
    acc = tm * in_p * 4                                # f32 accumulator scratch
    return adj + xb + wb + ob + acc


def gcn_kernel(adj_ref, x_ref, wt_ref, o_ref, acc_ref, *, x_resident, tk):
    k = pl.program_id(1)

    @pl.when(k == 0)
    def _():
        acc_ref[...] = jnp.zeros_like(acc_ref)

    if x_resident:
        # X lives fully in VMEM; take the K chunk for this contraction step.
        start = pl.multiple_of(k * tk, tk)
        x_blk = x_ref[pl.ds(start, tk), :]
    else:
        x_blk = x_ref[...]

    # Accumulate ax tile: (TM, TK) @ (TK, in_p) -> (TM, in_p), f32 MXU acc.
    acc_ref[...] += jnp.dot(adj_ref[...], x_blk,
                            preferred_element_type=jnp.float32)

    @pl.when(k == pl.num_programs(1) - 1)
    def _():
        # Fused second matmul against pre-transposed W: (TM, in_p) @ (in_p, out_p).
        out = jnp.dot(acc_ref[...].astype(wt_ref.dtype), wt_ref[...],
                      preferred_element_type=jnp.float32)
        o_ref[...] = out.astype(o_ref.dtype)


def manual_gcn_layer(x, adjm, weight, *, use_bf16=False):
    """out = (adjm @ x) @ weight.T  (ManualGCNLayer forward, bias-free Linear).

    use_bf16 feeds the MXU bf16 (f32 accumulation stays inside the kernel).
    Exact for 0/1 adjacency; lossy for weighted / normalized adjacency, so it
    is opt-in rather than a silent default.
    """
    n, in_dim = x.shape
    out_dim = weight.shape[0]

    # Lane-dense feature padding (multiples of 128) -> full MXU columns,
    # unmasked vst on the output. Zero padding is exact.
    in_p = _round_up(in_dim, 128)
    out_p = _round_up(out_dim, 128)

    compute_dtype = jnp.bfloat16 if use_bf16 else jnp.float32
    in_isz = jnp.dtype(compute_dtype).itemsize
    out_dtype = x.dtype
    out_isz = jnp.dtype(out_dtype).itemsize

    vmem_budget = 28 * _MIB  # fits v7x's 32 MiB scoped-VMEM default with margin

    if n <= 512:
        # Single contraction tile. Split rows into two tiles when possible so
        # the "parallel" grid axis has >= 2 entries (keeps both v7x TCs busy).
        n_p = _round_up(n, 16)
        tk = n_p
        tm = n_p // 2 if n_p >= 32 else n_p
    else:
        # Streamed adjacency: largest square tile (up to 1024) whose working
        # set fits the VMEM budget and whose padding overhead stays small.
        tm = tk = 256
        n_p = _round_up(n, 256)
        for cand in (1024, 512):
            cand_np = _round_up(n, cand)
            pad_ok = (cand_np - n) <= max(n // 8, 64)
            fits = _vmem_usage(cand, cand, cand_np, in_p, out_p,
                               in_isz, out_isz, False) <= vmem_budget
            if pad_ok and fits:
                tm = tk = cand
                n_p = cand_np
                break
        # TODO(synk): handle a ragged last K tile in-kernel (masked tail)
        # instead of padding the full N^2 adjacency when N is far from a
        # tile multiple; likewise skip all-zero adjacency tiles via a
        # scalar-prefetch block index for sparse graphs.

    # Keep X fully VMEM-resident when it fits: adjacency becomes the only
    # streamed operand and X is DMA'd exactly once (constant index_map).
    x_resident = _vmem_usage(tm, tk, n_p, in_p, out_p, in_isz, out_isz,
                             True) <= vmem_budget
    usage = _vmem_usage(tm, tk, n_p, in_p, out_p, in_isz, out_isz, x_resident)
    vmem_limit = int(min(max(usage + 8 * _MIB, 32 * _MIB), 48 * _MIB))

    # Cast BEFORE padding (pad pass writes half the bytes on the bf16 path);
    # pads are skipped when already aligned.
    adj_p = _pad2(adjm.astype(compute_dtype), n_p, n_p)
    x_p = _pad2(x.astype(compute_dtype), n_p, in_p)
    # Pre-transposed weight (in_p, out_p): one-time tiny wrapper transpose so
    # the in-kernel second matmul needs no relayout of W.
    wt_p = _pad2(weight.T.astype(compute_dtype), in_p, out_p)

    grid = (n_p // tm, n_p // tk)

    x_spec = (pl.BlockSpec((n_p, in_p), lambda i, k: (0, 0)) if x_resident
              else pl.BlockSpec((tk, in_p), lambda i, k: (k, 0)))

    x_bytes = x_p.size * x_p.dtype.itemsize
    cost = pl.CostEstimate(
        flops=2 * n_p * n_p * in_p + 2 * n_p * in_p * out_p,
        transcendentals=0,
        bytes_accessed=(adj_p.size * adj_p.dtype.itemsize
                        + (x_bytes if x_resident else x_bytes * (n_p // tm))
                        + wt_p.size * wt_p.dtype.itemsize
                        + n_p * out_p * out_isz),
    )

    kernel = functools.partial(gcn_kernel, x_resident=x_resident, tk=tk)

    out_padded = pl.pallas_call(
        kernel,
        out_shape=jax.ShapeDtypeStruct((n_p, out_p), out_dtype),
        grid_spec=pltpu.PrefetchScalarGridSpec(
            num_scalar_prefetch=0,
            grid=grid,
            in_specs=[
                pl.BlockSpec((tm, tk), lambda i, k: (i, k)),       # adj tile
                x_spec,                                            # X resident/strip
                pl.BlockSpec((in_p, out_p), lambda i, k: (0, 0)),  # W^T resident
            ],
            out_specs=pl.BlockSpec((tm, out_p), lambda i, k: (i, 0)),
            scratch_shapes=[pltpu.VMEM((tm, in_p), jnp.float32)],
        ),
        compiler_params=pltpu.CompilerParams(
            dimension_semantics=("parallel", "arbitrary"),
            vmem_limit_bytes=vmem_limit),
        cost_estimate=cost,
    )(adj_p, x_p, wt_p)

    return out_padded[:n, :out_dim]


if __name__ == "__main__":
    def ref_fwd(x, adjm, weight):
        hp = jax.lax.Precision.HIGHEST
        ax = jnp.matmul(adjm, x, precision=hp)
        return jnp.matmul(ax, weight.T, precision=hp)

    # Small, deterministic synthetic problem matching the module.
    N, IN_DIM, OUT_DIM = 8, 32, 16
    key = jax.random.PRNGKey(0)
    kx, ka, kw = jax.random.split(key, 3)

    x = jax.random.normal(kx, (N, IN_DIM), dtype=jnp.float32)
    adjm = jax.random.uniform(ka, (N, N), dtype=jnp.float32)
    # nn.Linear(in_dim, out_dim, bias=False).weight: (out_dim, in_dim)
    bound = 1.0 / jnp.sqrt(jnp.float32(IN_DIM))
    weight = jax.random.uniform(kw, (OUT_DIM, IN_DIM), dtype=jnp.float32,
                                minval=-bound, maxval=bound)

    ref = ref_fwd(x, adjm, weight)

    # Default f32 path: matches PyTorch numerics closely.
    out = jax.block_until_ready(manual_gcn_layer(x, adjm, weight))
    assert out.shape == (N, OUT_DIM)
    assert jnp.allclose(out, ref, atol=1e-3, rtol=1e-3)

    # Opt-in bf16-fed MXU path (f32 accumulation): looser tolerance.
    out_bf16 = jax.block_until_ready(
        manual_gcn_layer(x, adjm, weight, use_bf16=True))
    assert jnp.allclose(out_bf16, ref, atol=5e-2, rtol=5e-2)

    # Resident-X path with two row tiles (grid (2, 1)), fused second matmul.
    N2, IN2, OUT2 = 512, 128, 256
    kx2, ka2, kw2 = jax.random.split(jax.random.PRNGKey(1), 3)
    x2 = jax.random.normal(kx2, (N2, IN2), dtype=jnp.float32)
    adj2 = jax.random.uniform(ka2, (N2, N2), dtype=jnp.float32)
    w2 = jax.random.uniform(kw2, (OUT2, IN2), dtype=jnp.float32,
                            minval=-0.0625, maxval=0.0625)
    out2 = jax.block_until_ready(manual_gcn_layer(x2, adj2, w2))
    assert out2.shape == (N2, OUT2)
    assert jnp.allclose(out2, ref_fwd(x2, adj2, w2), atol=1e-2, rtol=1e-3)

    # Streamed adjacency, multi-step contraction (TM = TK = 512, grid (3, 3)).
    N3, IN3, OUT3 = 1536, 128, 128
    kx3, ka3, kw3 = jax.random.split(jax.random.PRNGKey(2), 3)
    x3 = jax.random.normal(kx3, (N3, IN3), dtype=jnp.float32)
    adj3 = jax.random.uniform(ka3, (N3, N3), dtype=jnp.float32)
    w3 = jax.random.uniform(kw3, (OUT3, IN3), dtype=jnp.float32,
                            minval=-0.088, maxval=0.088)
    out3 = jax.block_until_ready(manual_gcn_layer(x3, adj3, w3))
    assert out3.shape == (N3, OUT3)
    assert jnp.allclose(out3, ref_fwd(x3, adj3, w3), atol=1e-2, rtol=1e-3)

    print("KERNEL_OK")
</pallas_src>

<mosaic_0001>
module attributes {stable_mosaic.version = 11 : i64} {
  func.func @gcn_kernel(%arg0: i32, %arg1: i32, %arg2: memref<16x16xf32, #tpu.memory_space<vmem>>, %arg3: memref<16x128xf32, #tpu.memory_space<vmem>>, %arg4: memref<128x128xf32, #tpu.memory_space<vmem>>, %arg5: memref<16x128xf32, #tpu.memory_space<vmem>>, %arg6: memref<16x128xf32, #tpu.memory_space<vmem>>) attributes {dimension_semantics = [#tpu.dimension_semantics<parallel>, #tpu.dimension_semantics<arbitrary>], iteration_bounds = array<i64: 1, 1>, scalar_prefetch = 0 : i64, scratch_operands = 1 : i64, tpu.core_type = #tpu.core_type<tc>, window_params = [{transform_indices = @transform_0, window_bounds = array<i64: 16, 16>}, {pipeline_mode = #tpu.pipeline_mode<synchronous>, transform_indices = @transform_1, window_bounds = array<i64: 16, 128>}, {pipeline_mode = #tpu.pipeline_mode<synchronous>, transform_indices = @transform_2, window_bounds = array<i64: 128, 128>}, {transform_indices = @transform_3, window_bounds = array<i64: 16, 128>}]} {
    %c0_i32 = arith.constant 0 : i32
    %0 = arith.cmpi eq, %arg1, %c0_i32 : i32
    %1 = arith.extui %0 : i1 to i32
    %c0_i32_0 = arith.constant 0 : i32
    %2 = arith.cmpi ne, %1, %c0_i32_0 : i32
    scf.if %2 {
      %cst_9 = arith.constant 0.000000e+00 : f32
      %15 = vector.broadcast %cst_9 : f32 to vector<16x128xf32>
      %c0_10 = arith.constant 0 : index
      %c0_11 = arith.constant 0 : index
      %16 = vector.load %arg6[%c0_10, %c0_11] : memref<16x128xf32, #tpu.memory_space<vmem>>, vector<16x128xf32>
      tpu.vector_store %arg6[%c0_10, %c0_11], %15 {strides = array<i32>} : memref<16x128xf32, #tpu.memory_space<vmem>>, vector<16x128xf32>,
    } else {
    }
    %c16_i32 = arith.constant 16 : i32
    %3 = arith.muli %arg1, %c16_i32 : i32
    %4 = tpu.assume_multiple %3, 16 : i32
    %5 = arith.index_cast %4 : i32 to index
    %c0 = arith.constant 0 : index
    %6 = vector.load %arg3[%5, %c0] : memref<16x128xf32, #tpu.memory_space<vmem>>, vector<16x128xf32>
    %c0_1 = arith.constant 0 : index
    %c0_2 = arith.constant 0 : index
    %7 = vector.load %arg6[%c0_1, %c0_2] : memref<16x128xf32, #tpu.memory_space<vmem>>, vector<16x128xf32>
    %c0_3 = arith.constant 0 : index
    %c0_4 = arith.constant 0 : index
    %8 = vector.load %arg2[%c0_3, %c0_4] : memref<16x16xf32, #tpu.memory_space<vmem>>, vector<16x16xf32>
    %cst = arith.constant dense<0.000000e+00> : vector<16x128xf32>
    %9 = tpu.matmul %8, %6, %cst {dimension_numbers = #tpu.dot_dimension_numbers<[1], [0], [0], [1], [0, 0, 1, 1], [], []>} : vector<16x16xf32>, vector<16x128xf32>, vector<16x128xf32> -> vector<16x128xf32>
    %10 = arith.addf %7, %9 : vector<16x128xf32>
    %c0_5 = arith.constant 0 : index
    %c0_6 = arith.constant 0 : index
    %11 = vector.load %arg6[%c0_5, %c0_6] : memref<16x128xf32, #tpu.memory_space<vmem>>, vector<16x128xf32>
    tpu.vector_store %arg6[%c0_5, %c0_6], %10 {strides = array<i32>} : memref<16x128xf32, #tpu.memory_space<vmem>>, vector<16x128xf32>,
    %c0_i32_7 = arith.constant 0 : i32
    %12 = arith.cmpi eq, %arg1, %c0_i32_7 : i32
    %13 = arith.extui %12 : i1 to i32
    %c0_i32_8 = arith.constant 0 : i32
    %14 = arith.cmpi ne, %13, %c0_i32_8 : i32
    scf.if %14 {
      %c0_9 = arith.constant 0 : index
      %c0_10 = arith.constant 0 : index
      %15 = vector.load %arg6[%c0_9, %c0_10] : memref<16x128xf32, #tpu.memory_space<vmem>>, vector<16x128xf32>
      %c0_11 = arith.constant 0 : index
      %c0_12 = arith.constant 0 : index
      %16 = vector.load %arg4[%c0_11, %c0_12] : memref<128x128xf32, #tpu.memory_space<vmem>>, vector<128x128xf32>
      %cst_13 = arith.constant dense<0.000000e+00> : vector<16x128xf32>
      %17 = tpu.matmul %15, %16, %cst_13 {dimension_numbers = #tpu.dot_dimension_numbers<[1], [0], [0], [1], [0, 0, 1, 1], [], []>} : vector<16x128xf32>, vector<128x128xf32>, vector<16x128xf32> -> vector<16x128xf32>
      %c0_14 = arith.constant 0 : index
      %c0_15 = arith.constant 0 : index
      %18 = vector.load %arg5[%c0_14, %c0_15] : memref<16x128xf32, #tpu.memory_space<vmem>>, vector<16x128xf32>
      tpu.vector_store %arg5[%c0_14, %c0_15], %17 {strides = array<i32>} : memref<16x128xf32, #tpu.memory_space<vmem>>, vector<16x128xf32>,
    } else {
    }
    return
  }
  func.func @transform_0(%arg0: i32, %arg1: i32) -> (i32, i32) {
    %c0_i32 = arith.constant 0 : i32
    return %arg0, %arg1 : i32, i32
  }
  func.func @transform_1(%arg0: i32, %arg1: i32) -> (i32, i32) {
    %c0_i32 = arith.constant 0 : i32
    %c0_i32_0 = arith.constant 0 : i32
    %c0_i32_1 = arith.constant 0 : i32
    return %c0_i32, %c0_i32_0 : i32, i32
  }
  func.func @transform_2(%arg0: i32, %arg1: i32) -> (i32, i32) {
    %c0_i32 = arith.constant 0 : i32
    %c0_i32_0 = arith.constant 0 : i32
    %c0_i32_1 = arith.constant 0 : i32
    return %c0_i32, %c0_i32_0 : i32, i32
  }
  func.func @transform_3(%arg0: i32, %arg1: i32) -> (i32, i32) {
    %c0_i32 = arith.constant 0 : i32
    %c0_i32_0 = arith.constant 0 : i32
    return %arg0, %c0_i32 : i32, i32
  }
}

</mosaic_0001>

<llo_original>
// kernel: tpu_custom_call.1
$region0: #{tpu_custom_call.1}
  #allocation0 [shape = 'u32[]', space=smem, size = 0x4, offset = 0x4, fixed_abs, tag = 'smem constant byte address 0x4 - core index']
  #allocation1 [shape = 'u32[144,128]{1,0:T(1,128)}', space=vmem, size = 0x12000, scoped, tag = 'internal scratch']
  #allocation2 [shape = 'f32[16,128]{1,0:T(8,128)}', space=vmem, size = 0x2000, scoped, tag = 'scratch operand']
  %s0 = inlined_call_operand.hbm [shape: f32[16,16], index: 0, kind: input, shape index: {}]
  %s1 = inlined_call_operand.hbm [shape: f32[16,128], index: 1, kind: input, shape index: {}]
  %s2 = inlined_call_operand.hbm [shape: f32[128,128], index: 2, kind: input, shape index: {}]
  %s3 = inlined_call_operand.hbm [shape: f32[16,128], index: 3, kind: output, shape index: {}]
  %s4 = sld [smem:[#allocation0]]
  $region42: #{tpu_custom_call.1} parent=0
    _
  %s6 = ssub.s32 1, %s4
  %s7 = scalar_select 0, %s6, %s4
  $region1: #{tpu_custom_call.1} parent=0
    #allocation3 [shape = 'u8[8192]{0}', space=vmem, size = 0x2000, scoped, tag = 'input window, operand 0, single buffered']
    #allocation4 [shape = 's32[1]{0}', space=sflag, size = 0x4, scoped, tag = 'scoped memory for tpu_custom_call.1']
    #allocation5 [shape = 's32[1]{0}', space=sflag, size = 0x4, scoped, tag = 'scoped memory for tpu_custom_call.1']
    #allocation6 [shape = 'u8[8192]{0}', space=vmem, size = 0x2000, scoped, tag = 'input window, operand 1, single buffered']
    #allocation7 [shape = 's32[1]{0}', space=sflag, size = 0x4, scoped, tag = 'scoped memory for tpu_custom_call.1']
    #allocation8 [shape = 'u8[65536]{0}', space=vmem, size = 0x10000, scoped, tag = 'input window, operand 2, single buffered']
    #allocation9 [shape = 'u8[8192]{0}', space=vmem, size = 0x2000, scoped, tag = 'output window, operand 0, single buffered']
    %8 = vsyncpa [#allocation4], 0
    %9 = vsyncpa [#allocation7], 0
    %10 = vsyncpa [#allocation5], 0
    // Predicated region
    $region2: #{tpu_custom_call.1} parent=1 // pred_check
      _
    $region3: #{tpu_custom_call.1} parent=1 // pred_check_branch
      %12 = sbr.rel (0) target = $region5
    $region4: #{tpu_custom_call.1} parent=1 // pred_region
      %s14 = ssub.s32 256, 256
      %15 = vsyncadd [#allocation4], %s14
      %s16 = sshll.u32 [#allocation3], 4
      %s17 = int_to_ptr.vmem [resolvable:$true] %s16
      %22 = dma.hbm_to_vmem [thread:$0]  %s0, 256, %s17, [#allocation4], 128, 128, 8
    $region5: #{tpu_custom_call.1} parent=1 // pred_fallthru
      _
    // Predicated region
    $region6: #{tpu_custom_call.1} parent=1 // pred_check
      _
    $region7: #{tpu_custom_call.1} parent=1 // pred_check_branch
      %24 = sbr.rel (0) target = $region9
    $region8: #{tpu_custom_call.1} parent=1 // pred_region
      %s26 = ssub.s32 256, 256
      %27 = vsyncadd [#allocation7], %s26
      %s28 = sshll.u32 [#allocation6], 4
      %s29 = int_to_ptr.vmem [resolvable:$true] %s28
      %34 = dma.hbm_to_vmem [thread:$0]  %s1, 256, %s29, [#allocation7], 128, 128, 8
    $region9: #{tpu_custom_call.1} parent=1 // pred_fallthru
      _
    // Predicated region
    $region10: #{tpu_custom_call.1} parent=1 // pred_check
      _
    $region11: #{tpu_custom_call.1} parent=1 // pred_check_branch
      %36 = sbr.rel (0) target = $region13
    $region12: #{tpu_custom_call.1} parent=1 // pred_region
      %s38 = ssub.s32 2048, 2048
      %39 = vsyncadd [#allocation7], %s38
      %s40 = sshll.u32 [#allocation8], 4
      %s41 = int_to_ptr.vmem [resolvable:$true] %s40
      %46 = dma.hbm_to_vmem [thread:$0]  %s2, 2048, %s41, [#allocation7], 128, 128, 8
    $region13: #{tpu_custom_call.1} parent=1 // pred_fallthru
      _
    // Predicated region
    $region14: #{tpu_custom_call.1} parent=1 // pred_check
      _
    $region15: #{tpu_custom_call.1} parent=1 // pred_check_branch
      %48 = sbr.rel (0) target = $region17
    $region16: #{tpu_custom_call.1} parent=1 // pred_region
      %49 = dma.done [#allocation4], 256
    $region17: #{tpu_custom_call.1} parent=1 // pred_fallthru
      _
    // Predicated region
    $region18: #{tpu_custom_call.1} parent=1 // pred_check
      _
    $region19: #{tpu_custom_call.1} parent=1 // pred_check_branch
      %51 = sbr.rel (0) target = $region21
    $region20: #{tpu_custom_call.1} parent=1 // pred_region
      %52 = dma.done [#allocation7], 256
    $region21: #{tpu_custom_call.1} parent=1 // pred_fallthru
      _
    // Predicated region
    $region22: #{tpu_custom_call.1} parent=1 // pred_check
      _
    $region23: #{tpu_custom_call.1} parent=1 // pred_check_branch
      %54 = sbr.rel (0) target = $region25
    $region24: #{tpu_custom_call.1} parent=1 // pred_region
      %55 = dma.done [#allocation7], 2048
    $region25: #{tpu_custom_call.1} parent=1 // pred_fallthru
      _
    %p56 = scmp.eq.s32.totalorder 0, 0
    // Predicated region
    $region26: #{tpu_custom_call.1} parent=1 // pred_check
      %p57 = pneg %p56
    $region27: #{tpu_custom_call.1} parent=1 // pred_check_branch
      %59 = sbr.rel (%p57) target = $region29
    $region28: #{tpu_custom_call.1} parent=1 // pred_region
      %60 = vst [vmem:[#allocation2] sm:$0xff] 0.0
      %61 = vst [vmem:[#allocation2 + $0x8] sm:$0xff] 0.0
    $region29: #{tpu_custom_call.1} parent=1 // pred_fallthru
      _
    %s62 = smul.u32 0, 16
    %s63 = scalar_lea.vmem [#allocation6], %s62
    %v64 = vld [vmem:[%s63] sm:$0xff]
    %v65 = vld [vmem:[%s63 + $0x8] sm:$0xff]
    %v66 = vld [vmem:[#allocation2] sm:$0xff]
    %v67 = vld [vmem:[#allocation2 + $0x8] sm:$0xff]
    %v68 = vld [vmem:[#allocation3] sm:$0xff]
    %v69 = vld [vmem:[#allocation3 + $0x8] sm:$0xff]
    %vm70 = vcmask 130048
    %v72 = vsel %vm70, %v68, 0
    %v75 = vsel %vm70, %v69, 0
    %77 = vmatprep.subr.mxu0 0.0
    %78 = vmatpush1.msra.mxu0 0.0
    %79 = vmatprep.subr.mxu0 0.0
    %80 = vmatpush1.msra.mxu0 0.0
    %81 = vmatprep.subr.mxu0 0.0
    %82 = vmatpush1.msra.mxu0 0.0
    %83 = vmatprep.subr.mxu0 0.0
    %84 = vmatpush1.msra.mxu0 0.0
    %85 = vmatprep.subr.mxu0 0.0
    %86 = vmatpush1.msra.mxu0 0.0
    %87 = vmatprep.subr.mxu0 0.0
    %88 = vmatpush1.msra.mxu0 0.0
    %89 = vmatprep.subr.mxu0 0.0
    %90 = vmatpush1.msra.mxu0 0.0
    %91 = vmatprep.subr.mxu0 0.0
    %92 = vmatpush1.msra.mxu0 0.0
    %93 = vmatprep.subr.mxu0 0.0
    %94 = vmatpush1.msra.mxu0 0.0
    %95 = vmatprep.subr.mxu0 0.0
    %96 = vmatpush1.msra.mxu0 0.0
    %97 = vmatprep.subr.mxu0 0.0
    %98 = vmatpush1.msra.mxu0 0.0
    %99 = vmatprep.subr.mxu0 0.0
    %100 = vmatpush1.msra.mxu0 0.0
    %101 = vmatprep.subr.mxu0 0.0
    %102 = vmatpush1.msra.mxu0 0.0
    %103 = vmatprep.subr.mxu0 0.0
    %104 = vmatpush1.msra.mxu0 0.0
    %105 = vmatprep.subr.mxu0 0.0
    %106 = vmatpush1.msra.mxu0 %v65
    %107 = vmatprep.subr.mxu0 0.0
    %108 = vmatpush1.msra.mxu0 %v64
    %109 = vmatprep.subr.mxu0 0.0
    %110 = vmatpush2.msra.mxu0 0.0
    %111 = vmatprep.subr.mxu0 0.0
    %112 = vmatpush2.msra.mxu0 0.0
    %113 = vmatprep.subr.mxu0 0.0
    %114 = vmatpush2.msra.mxu0 0.0
    %115 = vmatprep.subr.mxu0 0.0
    %116 = vmatpush2.msra.mxu0 0.0
    %117 = vmatprep.subr.mxu0 0.0
    %118 = vmatpush2.msra.mxu0 0.0
    %119 = vmatprep.subr.mxu0 0.0
    %120 = vmatpush2.msra.mxu0 0.0
    %121 = vmatprep.subr.mxu0 0.0
    %122 = vmatpush2.msra.mxu0 0.0
    %123 = vmatprep.subr.mxu0 0.0
    %124 = vmatpush2.msra.mxu0 0.0
    %125 = vmatprep.subr.mxu0 0.0
    %126 = vmatpush2.msra.mxu0 0.0
    %127 = vmatprep.subr.mxu0 0.0
    %128 = vmatpush2.msra.mxu0 0.0
    %129 = vmatprep.subr.mxu0 0.0
    %130 = vmatpush2.msra.mxu0 0.0
    %131 = vmatprep.subr.mxu0 0.0
    %132 = vmatpush2.msra.mxu0 0.0
    %133 = vmatprep.subr.mxu0 0.0
    %134 = vmatpush2.msra.mxu0 0.0
    %135 = vmatprep.subr.mxu0 0.0
    %136 = vmatpush2.msra.mxu0 0.0
    %137 = vmatprep.subr.mxu0 0.0
    %138 = vmatpush2.msra.mxu0 0.0
    %139 = vmatprep.subr.mxu0 0.0
    %140 = vmatpush2.msra.mxu0 0.0
    %141 = vmatprep.mubr.f32.mxu0 0.0
    %142 = vmatmul.mubr.f32.gmra.mxu0 %v72
    %v143 = vpop.f32.mrf.mxu0
    %v144 = vadd.f32 0.0, %v143
    %v145 = vpop.f32.mrf.mxu0
    %146 = vmatprep.mubr.f32.mxu0 0.0
    %147 = vmatmul.mubr.f32.gmra.mxu0 %v75
    %v148 = vpop.f32.mrf.mxu0
    %v149 = vadd.f32 0.0, %v148
    %v150 = vpop.f32.mrf.mxu0
    %151 = vdwg.mxu0
    %v152 = vadd.f32 %v66, %v144
    %v153 = vadd.f32 %v67, %v149
    %154 = vst [vmem:[#allocation2] sm:$0xff] %v152
    %155 = vst [vmem:[#allocation2 + $0x8] sm:$0xff] %v153
    // Predicated region
    $region30: #{tpu_custom_call.1} parent=1 // pred_check
      %p156 = pneg %p56
    $region31: #{tpu_custom_call.1} parent=1 // pred_check_branch
      %158 = sbr.rel (%p156) target = $region33
    $region32: #{tpu_custom_call.1} parent=1 // pred_region
      %v159 = vld [vmem:[#allocation2] sm:$0xff]
      %v160 = vld [vmem:[#allocation2 + $0x8] sm:$0xff]
      %v161 = vld [vmem:[#allocation8] sm:$0xff]
      %v162 = vld [vmem:[#allocation8 + $0x8] sm:$0xff]
      %v163 = vld [vmem:[#allocation8 + $0x10] sm:$0xff]
      %v164 = vld [vmem:[#allocation8 + $0x18] sm:$0xff]
      %v165 = vld [vmem:[#allocation8 + $0x20] sm:$0xff]
      %v166 = vld [vmem:[#allocation8 + $0x28] sm:$0xff]
      %v167 = vld [vmem:[#allocation8 + $0x30] sm:$0xff]
      %v168 = vld [vmem:[#allocation8 + $0x38] sm:$0xff]
      %v169 = vld [vmem:[#allocation8 + $0x40] sm:$0xff]
      %v170 = vld [vmem:[#allocation8 + $0x48] sm:$0xff]
      %v171 = vld [vmem:[#allocation8 + $0x50] sm:$0xff]
      %v172 = vld [vmem:[#allocation8 + $0x58] sm:$0xff]
      %v173 = vld [vmem:[#allocation8 + $0x60] sm:$0xff]
      %v174 = vld [vmem:[#allocation8 + $0x68] sm:$0xff]
      %v175 = vld [vmem:[#allocation8 + $0x70] sm:$0xff]
      %v176 = vld [vmem:[#allocation8 + $0x78] sm:$0xff]
      %177 = vmatprep.subr.mxu0 0.0
      %178 = vmatpush1.msra.mxu0 %v176
      %179 = vmatprep.subr.mxu0 0.0
      %180 = vmatpush1.msra.mxu0 %v175
      %181 = vmatprep.subr.mxu0 0.0
      %182 = vmatpush1.msra.mxu0 %v174
      %183 = vmatprep.subr.mxu0 0.0
      %184 = vmatpush1.msra.mxu0 %v173
      %185 = vmatprep.subr.mxu0 0.0
      %186 = vmatpush1.msra.mxu0 %v172
      %187 = vmatprep.subr.mxu0 0.0
      %188 = vmatpush1.msra.mxu0 %v171
      %189 = vmatprep.subr.mxu0 0.0
      %190 = vmatpush1.msra.mxu0 %v170
      %191 = vmatprep.subr.mxu0 0.0
      %192 = vmatpush1.msra.mxu0 %v169
      %193 = vmatprep.subr.mxu0 0.0
      %194 = vmatpush1.msra.mxu0 %v168
      %195 = vmatprep.subr.mxu0 0.0
      %196 = vmatpush1.msra.mxu0 %v167
      %197 = vmatprep.subr.mxu0 0.0
      %198 = vmatpush1.msra.mxu0 %v166
      %199 = vmatprep.subr.mxu0 0.0
      %200 = vmatpush1.msra.mxu0 %v165
      %201 = vmatprep.subr.mxu0 0.0
      %202 = vmatpush1.msra.mxu0 %v164
      %203 = vmatprep.subr.mxu0 0.0
      %204 = vmatpush1.msra.mxu0 %v163
      %205 = vmatprep.subr.mxu0 0.0
      %206 = vmatpush1.msra.mxu0 %v162
      %207 = vmatprep.subr.mxu0 0.0
      %208 = vmatpush1.msra.mxu0 %v161
      %209 = vmatprep.subr.mxu0 0.0
      %210 = vmatpush2.msra.mxu0 0.0
      %211 = vmatprep.subr.mxu0 0.0
      %212 = vmatpush2.msra.mxu0 0.0
      %213 = vmatprep.subr.mxu0 0.0
      %214 = vmatpush2.msra.mxu0 0.0
      %215 = vmatprep.subr.mxu0 0.0
      %216 = vmatpush2.msra.mxu0 0.0
      %217 = vmatprep.subr.mxu0 0.0
      %218 = vmatpush2.msra.mxu0 0.0
      %219 = vmatprep.subr.mxu0 0.0
      %220 = vmatpush2.msra.mxu0 0.0
      %221 = vmatprep.subr.mxu0 0.0
      %222 = vmatpush2.msra.mxu0 0.0
      %223 = vmatprep.subr.mxu0 0.0
      %224 = vmatpush2.msra.mxu0 0.0
      %225 = vmatprep.subr.mxu0 0.0
      %226 = vmatpush2.msra.mxu0 0.0
      %227 = vmatprep.subr.mxu0 0.0
      %228 = vmatpush2.msra.mxu0 0.0
      %229 = vmatprep.subr.mxu0 0.0
      %230 = vmatpush2.msra.mxu0 0.0
      %231 = vmatprep.subr.mxu0 0.0
      %232 = vmatpush2.msra.mxu0 0.0
      %233 = vmatprep.subr.mxu0 0.0
      %234 = vmatpush2.msra.mxu0 0.0
      %235 = vmatprep.subr.mxu0 0.0
      %236 = vmatpush2.msra.mxu0 0.0
      %237 = vmatprep.subr.mxu0 0.0
      %238 = vmatpush2.msra.mxu0 0.0
      %239 = vmatprep.subr.mxu0 0.0
      %240 = vmatpush2.msra.mxu0 0.0
      %241 = vmatprep.mubr.f32.mxu0 0.0
      %242 = vmatmul.mubr.f32.gmra.mxu0 %v159
      %v243 = vpop.f32.mrf.mxu0
      %v244 = vadd.f32 0.0, %v243
      %v245 = vpop.f32.mrf.mxu0
      %246 = vmatprep.mubr.f32.mxu0 0.0
      %247 = vmatmul.mubr.f32.gmra.mxu0 %v160
      %v248 = vpop.f32.mrf.mxu0
      %v249 = vadd.f32 0.0, %v248
      %v250 = vpop.f32.mrf.mxu0
      %251 = vdwg.mxu0
      %252 = vst [vmem:[#allocation9] sm:$0xff] %v244
      %253 = vst [vmem:[#allocation9 + $0x8] sm:$0xff] %v249
    $region33: #{tpu_custom_call.1} parent=1 // pred_fallthru
      _
    // Predicated region
    $region34: #{tpu_custom_call.1} parent=1 // pred_check
      _
    $region35: #{tpu_custom_call.1} parent=1 // pred_check_branch
      %255 = sbr.rel (0) target = $region37
    $region36: #{tpu_custom_call.1} parent=1 // pred_region
      %s257 = ssub.s32 256, 256
      %258 = vsyncadd [#allocation5], %s257
      %s259 = sshll.u32 [#allocation9], 4
      %s260 = int_to_ptr.vmem [resolvable:$true] %s259
      %265 = dma.vmem_to_hbm [thread:$0]  %s260, 256, %s3, [#allocation5], 128, 128, 8
    $region37: #{tpu_custom_call.1} parent=1 // pred_fallthru
      _
    // Predicated region
    $region38: #{tpu_custom_call.1} parent=1 // pred_check
      _
    $region39: #{tpu_custom_call.1} parent=1 // pred_check_branch
      %267 = sbr.rel (0) target = $region41
    $region40: #{tpu_custom_call.1} parent=1 // pred_region
      %268 = dma.done [#allocation5], 256
    $region41: #{tpu_custom_call.1} parent=1 // pred_fallthru
      _
    %269 = vsyncpa [#allocation4], 1
    %270 = vsyncpa [#allocation7], 1
    %271 = vsyncpa [#allocation5], 1

</llo_original>
